<compile_context>
chip_gen: v7x
topology: tpu7x:2x2x1
jax: 0.10.0
libtpu: 0.0.40
codegen_flags: <defaults>
</compile_context>

<pallas_src>
import functools
import math

import jax
import jax.numpy as jnp
import numpy as np
from jax.experimental import pallas as pl
from jax.experimental.pallas import tpu as pltpu

# ----------------------------- model hyper-params (small) -----------------------------
B = 2            # batch
L = 16           # sequence length
C = 32           # embed_dim
NUM_HEADS = 4
HEAD_DIM = C // NUM_HEADS
COND_DIM = 16
MLP_RATIO = 4.0
HIDDEN = int(C * MLP_RATIO)          # 128
ATTN_SCALE = 1.0 / math.sqrt(HEAD_DIM)
LN_EPS = 1e-5
_GELU_C = 0.7978845608028654         # sqrt(2/pi), GELU(approximate='tanh')
NEG = -1e30                          # finite mask value (avoids inf-inf NaNs)

# rows of the packed (8, 128) small-vector slab
_ROW_LN_W, _ROW_LN_B, _ROW_PROJ_B, _ROW_FC1_B, _ROW_FC2_B, _ROW_QKV_B = 0, 1, 2, 3, 4, 5


# ----------------------------------- Pallas kernel ------------------------------------
def adaln_block_kernel(x_ref, mod_ref, bias_ref, mask_ref,
                       qkv_w_ref, proj_w_ref, fc1_w_ref, fc2_w_ref, vec_ref,
                       out_ref, *, num_heads, hidden):
    c = x_ref.shape[1]
    cdt = jnp.bfloat16                  # MXU operand dtype; all accumulation in f32

    # ---- small packed vectors (one (8,128) slab) ----
    vec = vec_ref[...]
    ln_w   = vec[_ROW_LN_W:_ROW_LN_W + 1, :c]
    ln_b   = vec[_ROW_LN_B:_ROW_LN_B + 1, :c]
    proj_b = vec[_ROW_PROJ_B:_ROW_PROJ_B + 1, :c]
    fc1_b  = vec[_ROW_FC1_B:_ROW_FC1_B + 1, :hidden]
    fc2_b  = vec[_ROW_FC2_B:_ROW_FC2_B + 1, :c]
    qkv_b  = vec[_ROW_QKV_B:_ROW_QKV_B + 1, :3 * c]

    def layer_norm(z):                  # rows of (B*L, C), f32
        mu = jnp.mean(z, axis=-1, keepdims=True)
        d = z - mu
        var = jnp.mean(d * d, axis=-1, keepdims=True)
        return d * jax.lax.rsqrt(var + LN_EPS) * ln_w + ln_b

    x = x_ref[...]                      # (B*L, C) f32
    g1, g2 = mod_ref[0], mod_ref[1]     # adaLN rows, already broadcast to (B*L, C)
    s1p, s2p = mod_ref[2], mod_ref[3]   # 1 + scale folded host-side
    sh1, sh2 = mod_ref[4], mod_ref[5]
    mask = mask_ref[...]                # (H*B*L, C) bf16 head-group mask / segment matrix

    # -------------------------------- attention --------------------------------
    h1 = (layer_norm(x) * s1p + sh1).astype(cdt)                          # (B*L, C)
    qkv = jnp.dot(h1, qkv_w_ref[...],
                  preferred_element_type=jnp.float32) + qkv_b             # (B*L, 3C)
    q = qkv[:, :c].astype(cdt)               # scale & q_bias folded host-side
    k = qkv[:, c:2 * c].astype(cdt)
    v = qkv[:, 2 * c:3 * c].astype(cdt)

    # replicate K/V once per head-group of score columns and lane-mask to that head
    k_exp = jnp.concatenate([k] * num_heads, axis=0) * mask               # (H*B*L, C)
    v_exp = jnp.concatenate([v] * num_heads, axis=0) * mask               # (H*B*L, C)

    # block-diagonal scores: one matmul, bias slab carries attn_bias + cross-batch mask
    s = jnp.einsum('qc,jc->qj', q, k_exp,
                   preferred_element_type=jnp.float32) + bias_ref[...]    # (B*L, H*B*L)
    m = jnp.max(s, axis=-1, keepdims=True)       # global row max (softmax-invariant)
    p = jnp.exp(s - m).astype(cdt)               # masked columns -> exactly 0

    # per-(row, head) softmax denominator via the same mask matrix (sum + broadcast)
    denom = jnp.dot(p, mask, preferred_element_type=jnp.float32)          # (B*L, C)
    ctx = jnp.dot(p, v_exp, preferred_element_type=jnp.float32)           # (B*L, C)
    ctx = ctx * pl.reciprocal(denom, approx=True)

    attn = jnp.dot(ctx.astype(cdt), proj_w_ref[...],
                   preferred_element_type=jnp.float32) + proj_b           # (B*L, C)
    x1 = x + attn * g1

    # ----------------------------------- FFN -----------------------------------
    h2 = (layer_norm(x1) * s2p + sh2).astype(cdt)
    ff = jnp.dot(h2, fc1_w_ref[...], preferred_element_type=jnp.float32) + fc1_b
    ff = 0.5 * ff * (1.0 + jnp.tanh(_GELU_C * (ff + 0.044715 * ff * ff * ff)))
    ff = jnp.dot(ff.astype(cdt), fc2_w_ref[...],
                 preferred_element_type=jnp.float32) + fc2_b

    out_ref[...] = x1 + ff * g2


# ------------------------------------- wrapper -----------------------------------------
def adaln_self_attn(x, cond, attn_bias, params):
    b, l, c = x.shape
    nh, hd = NUM_HEADS, HEAD_DIM
    hidden = params["fc1_w"].shape[-1]
    bl = b * l
    assert c <= 128 and hidden <= 128 and 3 * c <= 128, "packed vec slab assumes <=128"
    wdt = jnp.bfloat16

    # adaLN modulation for the whole batch, broadcast to (6, B*L, C) rows; "1 + scale"
    # folded host-side.  (Layout plumbing, not compute hoisting.)
    silu = cond * jax.nn.sigmoid(cond)
    ada = (silu @ params["ada_w"] + params["ada_b"]).reshape(b, 6, c)
    ada = ada.at[:, 2:4, :].add(1.0)                      # scale1, scale2 -> 1 + scale
    mod = jnp.transpose(ada, (1, 0, 2))[:, :, None, :]    # (6, B, 1, C)
    mod = jnp.broadcast_to(mod, (6, b, l, c)).reshape(6, bl, c).astype(jnp.float32)

    # QKV weights kept as (C, 3C); attention scale + biases folded into the Q columns.
    col_scale = jnp.concatenate(
        [jnp.full((c,), ATTN_SCALE, jnp.float32), jnp.ones((2 * c,), jnp.float32)])
    qkv_w = (params["qkv_w"].astype(jnp.float32) * col_scale[None, :]).astype(wdt)
    qkv_b = (params["qkv_b"].reshape(-1).astype(jnp.float32) * col_scale)   # (3C,)
    proj_w = params["proj_w"].astype(wdt)
    fc1_w = params["fc1_w"].astype(wdt)
    fc2_w = params["fc2_w"].astype(wdt)

    # Fused attn_bias + cross-batch mask slab, tiled over head groups: (B*L, H*B*L).
    blockdiag = jnp.kron(jnp.eye(b, dtype=jnp.float32), jnp.ones((l, l), jnp.float32))
    bias_bd = jnp.where(blockdiag > 0,
                        jnp.tile(attn_bias.astype(jnp.float32), (b, b)),
                        jnp.float32(NEG))                         # (B*L, B*L)
    bias_slab = jnp.tile(bias_bd, (1, nh))                        # (B*L, H*B*L)

    # Head-group mask: (H*B*L, C); row group h has ones on that head's hd lanes.
    # Doubles as the segmented-softmax sum/broadcast matrix inside the kernel.
    head_mask = jnp.kron(jnp.kron(jnp.eye(nh, dtype=jnp.float32),
                                  jnp.ones((bl, 1), jnp.float32)),
                         jnp.ones((1, hd), jnp.float32)).astype(wdt)   # (H*B*L, C)

    # Pack all small bias / LN vectors into one (8,128)-aligned slab.
    def _row(v):
        v = jnp.asarray(v, jnp.float32).reshape(-1)
        return jnp.pad(v, (0, 128 - v.shape[0]))
    zero_row = jnp.zeros((128,), jnp.float32)
    vec_slab = jnp.stack([
        _row(params["ln_w"]), _row(params["ln_b"]), _row(params["proj_b"]),
        _row(params["fc1_b"]), _row(params["fc2_b"]), _row(qkv_b),
        zero_row, zero_row])                                      # (8, 128)

    x2 = x.reshape(bl, c).astype(jnp.float32)

    kernel = functools.partial(adaln_block_kernel, num_heads=nh, hidden=hidden)

    def full_spec(shape):
        nd = len(shape)
        return pl.BlockSpec(shape, lambda i, _nd=nd: (0,) * _nd)

    in_specs = [
        full_spec((bl, c)),            # x (batch folded into rows)
        full_spec((6, bl, c)),         # adaLN modulation rows
        full_spec((bl, nh * bl)),      # bias + cross-batch mask slab
        full_spec((nh * bl, c)),       # head-group mask / segment matrix
        full_spec((c, 3 * c)),         # qkv weight
        full_spec((c, c)),             # proj weight
        full_spec((c, hidden)),        # fc1 weight
        full_spec((hidden, c)),        # fc2 weight
        full_spec((8, 128)),           # small-vector slab
    ]
    out_specs = full_spec((bl, c))

    out = pl.pallas_call(
        kernel,
        out_shape=jax.ShapeDtypeStruct((bl, c), jnp.float32),
        grid=(1,),                     # single TC invocation at this size (v7x feedback)
        in_specs=in_specs,
        out_specs=out_specs,
        compiler_params=pltpu.CompilerParams(dimension_semantics=("arbitrary",)),
    )(x2, mod, bias_slab, head_mask, qkv_w, proj_w, fc1_w, fc2_w, vec_slab)
    return out.reshape(b, l, c)


# ------------------------------ pure-JAX reference check --------------------------------
def reference(x, cond, attn_bias, p):
    silu = cond * jax.nn.sigmoid(cond)
    ada = silu @ p["ada_w"] + p["ada_b"]                       # (B, 6C)
    g1, g2, s1, s2, sh1, sh2 = [ada[:, i * C:(i + 1) * C][:, None, :] for i in range(6)]

    def ln(z):
        mu = jnp.mean(z, axis=-1, keepdims=True)
        var = jnp.mean((z - mu) ** 2, axis=-1, keepdims=True)
        return (z - mu) * jax.lax.rsqrt(var + LN_EPS) * p["ln_w"] + p["ln_b"]

    h1 = ln(x) * (1 + s1) + sh1
    qkv = h1 @ p["qkv_w"] + p["qkv_b"]                         # (B, L, 3C)
    qkv = qkv.reshape(B, L, 3, NUM_HEADS, HEAD_DIM)
    q, k, v = qkv[:, :, 0], qkv[:, :, 1], qkv[:, :, 2]         # (B, L, H, hd)
    scores = jnp.einsum("blhd,bmhd->bhlm", q * ATTN_SCALE, k) + attn_bias[None, None]
    pattn = jax.nn.softmax(scores, axis=-1)
    ao = jnp.einsum("bhlm,bmhd->blhd", pattn, v).reshape(B, L, C)
    ao = ao @ p["proj_w"] + p["proj_b"]
    x1 = x + ao * g1

    h2 = ln(x1) * (1 + s2) + sh2
    ff = h2 @ p["fc1_w"] + p["fc1_b"]
    ff = 0.5 * ff * (1.0 + jnp.tanh(_GELU_C * (ff + 0.044715 * ff ** 3)))
    ff = ff @ p["fc2_w"] + p["fc2_b"]
    return x1 + ff * g2


# -------------------------------------- main --------------------------------------------
def init_params(key):
    ks = jax.random.split(key, 10)
    s = 0.02
    q_bias = jnp.zeros((C,), jnp.float32)          # nn.Parameter(torch.zeros(embed_dim))
    v_bias = jnp.zeros((C,), jnp.float32)
    zero_k = jnp.zeros((C,), jnp.float32)
    params = {
        "ada_w":  jax.random.normal(ks[0], (COND_DIM, 6 * C), jnp.float32) * s,
        "ada_b":  (jax.random.normal(ks[1], (6 * C,), jnp.float32) * s)[None, :],
        "ln_w":   jnp.ones((1, C), jnp.float32),
        "ln_b":   jnp.zeros((1, C), jnp.float32),
        "qkv_w":  jax.random.normal(ks[2], (C, 3 * C), jnp.float32) * s,
        "qkv_b":  jnp.concatenate([q_bias, zero_k, v_bias])[None, :],   # (1, 3C)
        "proj_w": jax.random.normal(ks[3], (C, C), jnp.float32) * s,
        "proj_b": (jax.random.normal(ks[4], (C,), jnp.float32) * s)[None, :],
        "fc1_w":  jax.random.normal(ks[5], (C, HIDDEN), jnp.float32) * s,
        "fc1_b":  (jax.random.normal(ks[6], (HIDDEN,), jnp.float32) * s)[None, :],
        "fc2_w":  jax.random.normal(ks[7], (HIDDEN, C), jnp.float32) * s,
        "fc2_b":  (jax.random.normal(ks[8], (C,), jnp.float32) * s)[None, :],
    }
    return params


if __name__ == "__main__":
    key = jax.random.PRNGKey(0)
    kx, kc, kb, kp = jax.random.split(key, 4)
    x = jax.random.normal(kx, (B, L, C), jnp.float32)
    cond = jax.random.normal(kc, (B, COND_DIM), jnp.float32)
    attn_bias = jax.random.normal(kb, (L, L), jnp.float32) * 0.1
    params = init_params(kp)

    out = adaln_self_attn(x, cond, attn_bias, params)
    out = jax.block_until_ready(out)

    ref = jax.block_until_ready(reference(x, cond, attn_bias, params))
    # Tolerance accounts for bf16 matmul operands + approx softmax reciprocal
    # (f32 accumulation everywhere; measured error is ~1e-5 at these shapes).
    np.testing.assert_allclose(np.asarray(out), np.asarray(ref), rtol=5e-4, atol=5e-4)
    print("KERNEL_OK")
</pallas_src>

<mosaic_0001>
module attributes {stable_mosaic.version = 11 : i64} {
  func.func @adaln_block_kernel(%arg0: i32, %arg1: memref<32x32xf32, #tpu.memory_space<vmem>>, %arg2: memref<6x32x32xf32, #tpu.memory_space<vmem>>, %arg3: memref<32x128xf32, #tpu.memory_space<vmem>>, %arg4: memref<128x32xbf16, #tpu.memory_space<vmem>>, %arg5: memref<32x96xbf16, #tpu.memory_space<vmem>>, %arg6: memref<32x32xbf16, #tpu.memory_space<vmem>>, %arg7: memref<32x128xbf16, #tpu.memory_space<vmem>>, %arg8: memref<128x32xbf16, #tpu.memory_space<vmem>>, %arg9: memref<8x128xf32, #tpu.memory_space<vmem>>, %arg10: memref<32x32xf32, #tpu.memory_space<vmem>>) attributes {dimension_semantics = [#tpu.dimension_semantics<arbitrary>], iteration_bounds = array<i64: 1>, scalar_prefetch = 0 : i64, scratch_operands = 0 : i64, tpu.core_type = #tpu.core_type<tc>, window_params = [{pipeline_mode = #tpu.pipeline_mode<synchronous>, transform_indices = @transform_0, window_bounds = array<i64: 32, 32>}, {pipeline_mode = #tpu.pipeline_mode<synchronous>, transform_indices = @transform_1, window_bounds = array<i64: 6, 32, 32>}, {pipeline_mode = #tpu.pipeline_mode<synchronous>, transform_indices = @transform_2, window_bounds = array<i64: 32, 128>}, {pipeline_mode = #tpu.pipeline_mode<synchronous>, transform_indices = @transform_3, window_bounds = array<i64: 128, 32>}, {pipeline_mode = #tpu.pipeline_mode<synchronous>, transform_indices = @transform_4, window_bounds = array<i64: 32, 96>}, {pipeline_mode = #tpu.pipeline_mode<synchronous>, transform_indices = @transform_5, window_bounds = array<i64: 32, 32>}, {pipeline_mode = #tpu.pipeline_mode<synchronous>, transform_indices = @transform_6, window_bounds = array<i64: 32, 128>}, {pipeline_mode = #tpu.pipeline_mode<synchronous>, transform_indices = @transform_7, window_bounds = array<i64: 128, 32>}, {pipeline_mode = #tpu.pipeline_mode<synchronous>, transform_indices = @transform_8, window_bounds = array<i64: 8, 128>}, {pipeline_mode = #tpu.pipeline_mode<synchronous>, transform_indices = @transform_9, window_bounds = array<i64: 32, 32>}]} {
    %c0 = arith.constant 0 : index
    %c0_0 = arith.constant 0 : index
    %0 = vector.load %arg9[%c0, %c0_0] : memref<8x128xf32, #tpu.memory_space<vmem>>, vector<8x128xf32>
    %1 = vector.extract_strided_slice %0 {offsets = [0, 0], sizes = [1, 32], strides = [1, 1]} : vector<8x128xf32> to vector<1x32xf32>
    %2 = vector.extract_strided_slice %0 {offsets = [1, 0], sizes = [1, 32], strides = [1, 1]} : vector<8x128xf32> to vector<1x32xf32>
    %3 = vector.extract_strided_slice %0 {offsets = [2, 0], sizes = [1, 32], strides = [1, 1]} : vector<8x128xf32> to vector<1x32xf32>
    %4 = vector.extract_strided_slice %0 {offsets = [3, 0], sizes = [1, 128], strides = [1, 1]} : vector<8x128xf32> to vector<1x128xf32>
    %5 = vector.extract_strided_slice %0 {offsets = [4, 0], sizes = [1, 32], strides = [1, 1]} : vector<8x128xf32> to vector<1x32xf32>
    %6 = vector.extract_strided_slice %0 {offsets = [5, 0], sizes = [1, 96], strides = [1, 1]} : vector<8x128xf32> to vector<1x96xf32>
    %c0_1 = arith.constant 0 : index
    %c0_2 = arith.constant 0 : index
    %7 = vector.load %arg1[%c0_1, %c0_2] : memref<32x32xf32, #tpu.memory_space<vmem>>, vector<32x32xf32>
    %c0_3 = arith.constant 0 : index
    %c0_4 = arith.constant 0 : index
    %c0_5 = arith.constant 0 : index
    %8 = vector.load %arg2[%c0_3, %c0_4, %c0_5] : memref<6x32x32xf32, #tpu.memory_space<vmem>>, vector<1x32x32xf32>
    %9 = vector.shape_cast %8 : vector<1x32x32xf32> to vector<32x32xf32>
    %c1 = arith.constant 1 : index
    %c0_6 = arith.constant 0 : index
    %c0_7 = arith.constant 0 : index
    %10 = vector.load %arg2[%c1, %c0_6, %c0_7] : memref<6x32x32xf32, #tpu.memory_space<vmem>>, vector<1x32x32xf32>
    %11 = vector.shape_cast %10 : vector<1x32x32xf32> to vector<32x32xf32>
    %c2 = arith.constant 2 : index
    %c0_8 = arith.constant 0 : index
    %c0_9 = arith.constant 0 : index
    %12 = vector.load %arg2[%c2, %c0_8, %c0_9] : memref<6x32x32xf32, #tpu.memory_space<vmem>>, vector<1x32x32xf32>
    %13 = vector.shape_cast %12 : vector<1x32x32xf32> to vector<32x32xf32>
    %c3 = arith.constant 3 : index
    %c0_10 = arith.constant 0 : index
    %c0_11 = arith.constant 0 : index
    %14 = vector.load %arg2[%c3, %c0_10, %c0_11] : memref<6x32x32xf32, #tpu.memory_space<vmem>>, vector<1x32x32xf32>
    %15 = vector.shape_cast %14 : vector<1x32x32xf32> to vector<32x32xf32>
    %c4 = arith.constant 4 : index
    %c0_12 = arith.constant 0 : index
    %c0_13 = arith.constant 0 : index
    %16 = vector.load %arg2[%c4, %c0_12, %c0_13] : memref<6x32x32xf32, #tpu.memory_space<vmem>>, vector<1x32x32xf32>
    %17 = vector.shape_cast %16 : vector<1x32x32xf32> to vector<32x32xf32>
    %c5 = arith.constant 5 : index
    %c0_14 = arith.constant 0 : index
    %c0_15 = arith.constant 0 : index
    %18 = vector.load %arg2[%c5, %c0_14, %c0_15] : memref<6x32x32xf32, #tpu.memory_space<vmem>>, vector<1x32x32xf32>
    %19 = vector.shape_cast %18 : vector<1x32x32xf32> to vector<32x32xf32>
    %c0_16 = arith.constant 0 : index
    %c0_17 = arith.constant 0 : index
    %20 = vector.load %arg4[%c0_16, %c0_17] : memref<128x32xbf16, #tpu.memory_space<vmem>>, vector<128x32xbf16>
    %cst = arith.constant dense<0.000000e+00> : vector<32xf32>
    %21 = vector.multi_reduction <add>, %7, %cst [1] : vector<32x32xf32> to vector<32xf32>
    %22 = vector.shape_cast %21 : vector<32xf32> to vector<32x1xf32>
    %cst_18 = arith.constant 3.200000e+01 : f32
    %23 = vector.broadcast %cst_18 : f32 to vector<32x1xf32>
    %24 = arith.divf %22, %23 : vector<32x1xf32>
    %25 = vector.broadcast %24 : vector<32x1xf32> to vector<32x32xf32>
    %26 = arith.subf %7, %25 : vector<32x32xf32>
    %27 = arith.mulf %26, %26 : vector<32x32xf32>
    %cst_19 = arith.constant dense<0.000000e+00> : vector<32xf32>
    %28 = vector.multi_reduction <add>, %27, %cst_19 [1] : vector<32x32xf32> to vector<32xf32>
    %29 = vector.shape_cast %28 : vector<32xf32> to vector<32x1xf32>
    %cst_20 = arith.constant 3.200000e+01 : f32
    %30 = vector.broadcast %cst_20 : f32 to vector<32x1xf32>
    %31 = arith.divf %29, %30 : vector<32x1xf32>
    %cst_21 = arith.constant 9.99999974E-6 : f32
    %32 = vector.broadcast %cst_21 : f32 to vector<32x1xf32>
    %33 = arith.addf %31, %32 : vector<32x1xf32>
    %34 = math.rsqrt %33 : vector<32x1xf32>
    %35 = vector.broadcast %34 : vector<32x1xf32> to vector<32x32xf32>
    %36 = arith.mulf %26, %35 : vector<32x32xf32>
    %37 = vector.broadcast %1 : vector<1x32xf32> to vector<32x32xf32>
    %38 = arith.mulf %36, %37 : vector<32x32xf32>
    %39 = vector.broadcast %2 : vector<1x32xf32> to vector<32x32xf32>
    %40 = arith.addf %38, %39 : vector<32x32xf32>
    %41 = arith.mulf %40, %13 : vector<32x32xf32>
    %42 = arith.addf %41, %17 : vector<32x32xf32>
    %43 = arith.truncf %42 : vector<32x32xf32> to vector<32x32xbf16>
    %c0_22 = arith.constant 0 : index
    %c0_23 = arith.constant 0 : index
    %44 = vector.load %arg5[%c0_22, %c0_23] : memref<32x96xbf16, #tpu.memory_space<vmem>>, vector<32x96xbf16>
    %cst_24 = arith.constant dense<0.000000e+00> : vector<32x96xf32>
    %45 = tpu.matmul %43, %44, %cst_24 {dimension_numbers = #tpu.dot_dimension_numbers<[1], [0], [0], [1], [0, 0, 1, 1], [], []>} : vector<32x32xbf16>, vector<32x96xbf16>, vector<32x96xf32> -> vector<32x96xf32>
    %46 = vector.broadcast %6 : vector<1x96xf32> to vector<32x96xf32>
    %47 = arith.addf %45, %46 : vector<32x96xf32>
    %48 = vector.extract_strided_slice %47 {offsets = [0, 0], sizes = [32, 32], strides = [1, 1]} : vector<32x96xf32> to vector<32x32xf32>
    %49 = arith.truncf %48 : vector<32x32xf32> to vector<32x32xbf16>
    %50 = vector.extract_strided_slice %47 {offsets = [0, 32], sizes = [32, 32], strides = [1, 1]} : vector<32x96xf32> to vector<32x32xf32>
    %51 = arith.truncf %50 : vector<32x32xf32> to vector<32x32xbf16>
    %52 = vector.extract_strided_slice %47 {offsets = [0, 64], sizes = [32, 32], strides = [1, 1]} : vector<32x96xf32> to vector<32x32xf32>
    %53 = arith.truncf %52 : vector<32x32xf32> to vector<32x32xbf16>
    %54 = tpu.concatenate %51, %51, %51, %51 in 0 : vector<32x32xbf16>, vector<32x32xbf16>, vector<32x32xbf16>, vector<32x32xbf16> -> vector<128x32xbf16>
    %55 = arith.mulf %54, %20 : vector<128x32xbf16>
    %56 = tpu.concatenate %53, %53, %53, %53 in 0 : vector<32x32xbf16>, vector<32x32xbf16>, vector<32x32xbf16>, vector<32x32xbf16> -> vector<128x32xbf16>
    %57 = arith.mulf %56, %20 : vector<128x32xbf16>
    "tpu.trace_start"() <{level = 10 : i32, message = "qc,jc->qj"}> : () -> ()
    %cst_25 = arith.constant dense<0.000000e+00> : vector<32x128xf32>
    %58 = tpu.matmul %49, %55, %cst_25 {dimension_numbers = #tpu.dot_dimension_numbers<[1], [1], [0], [0], [0, 0, 1, 0], [], []>} : vector<32x32xbf16>, vector<128x32xbf16>, vector<32x128xf32> -> vector<32x128xf32>
    "tpu.trace_stop"() : () -> ()
    %c0_26 = arith.constant 0 : index
    %c0_27 = arith.constant 0 : index
    %59 = vector.load %arg3[%c0_26, %c0_27] : memref<32x128xf32, #tpu.memory_space<vmem>>, vector<32x128xf32>
    %60 = arith.addf %58, %59 : vector<32x128xf32>
    %cst_28 = arith.constant dense<0xFF800000> : vector<32xf32>
    %61 = vector.multi_reduction <maximumf>, %60, %cst_28 [1] : vector<32x128xf32> to vector<32xf32>
    %62 = vector.shape_cast %61 : vector<32xf32> to vector<32x1xf32>
    %63 = vector.broadcast %62 : vector<32x1xf32> to vector<32x128xf32>
    %64 = arith.subf %60, %63 : vector<32x128xf32>
    %65 = math.exp %64 : vector<32x128xf32>
    %66 = arith.truncf %65 : vector<32x128xf32> to vector<32x128xbf16>
    %cst_29 = arith.constant dense<0.000000e+00> : vector<32x32xf32>
    %67 = tpu.matmul %66, %20, %cst_29 {dimension_numbers = #tpu.dot_dimension_numbers<[1], [0], [0], [1], [0, 0, 1, 1], [], []>} : vector<32x128xbf16>, vector<128x32xbf16>, vector<32x32xf32> -> vector<32x32xf32>
    %cst_30 = arith.constant dense<0.000000e+00> : vector<32x32xf32>
    %68 = tpu.matmul %66, %57, %cst_30 {dimension_numbers = #tpu.dot_dimension_numbers<[1], [0], [0], [1], [0, 0, 1, 1], [], []>} : vector<32x128xbf16>, vector<128x32xbf16>, vector<32x32xf32> -> vector<32x32xf32>
    %69 = tpu.reciprocal %67 {approx = true} : vector<32x32xf32> -> vector<32x32xf32>
    %70 = arith.mulf %68, %69 : vector<32x32xf32>
    %71 = arith.truncf %70 : vector<32x32xf32> to vector<32x32xbf16>
    %c0_31 = arith.constant 0 : index
    %c0_32 = arith.constant 0 : index
    %72 = vector.load %arg6[%c0_31, %c0_32] : memref<32x32xbf16, #tpu.memory_space<vmem>>, vector<32x32xbf16>
    %cst_33 = arith.constant dense<0.000000e+00> : vector<32x32xf32>
    %73 = tpu.matmul %71, %72, %cst_33 {dimension_numbers = #tpu.dot_dimension_numbers<[1], [0], [0], [1], [0, 0, 1, 1], [], []>} : vector<32x32xbf16>, vector<32x32xbf16>, vector<32x32xf32> -> vector<32x32xf32>
    %74 = vector.broadcast %3 : vector<1x32xf32> to vector<32x32xf32>
    %75 = arith.addf %73, %74 : vector<32x32xf32>
    %76 = arith.mulf %75, %9 : vector<32x32xf32>
    %77 = arith.addf %7, %76 : vector<32x32xf32>
    %cst_34 = arith.constant dense<0.000000e+00> : vector<32xf32>
    %78 = vector.multi_reduction <add>, %77, %cst_34 [1] : vector<32x32xf32> to vector<32xf32>
    %79 = vector.shape_cast %78 : vector<32xf32> to vector<32x1xf32>
    %cst_35 = arith.constant 3.200000e+01 : f32
    %80 = vector.broadcast %cst_35 : f32 to vector<32x1xf32>
    %81 = arith.divf %79, %80 : vector<32x1xf32>
    %82 = vector.broadcast %81 : vector<32x1xf32> to vector<32x32xf32>
    %83 = arith.subf %77, %82 : vector<32x32xf32>
    %84 = arith.mulf %83, %83 : vector<32x32xf32>
    %cst_36 = arith.constant dense<0.000000e+00> : vector<32xf32>
    %85 = vector.multi_reduction <add>, %84, %cst_36 [1] : vector<32x32xf32> to vector<32xf32>
    %86 = vector.shape_cast %85 : vector<32xf32> to vector<32x1xf32>
    %cst_37 = arith.constant 3.200000e+01 : f32
    %87 = vector.broadcast %cst_37 : f32 to vector<32x1xf32>
    %88 = arith.divf %86, %87 : vector<32x1xf32>
    %cst_38 = arith.constant 9.99999974E-6 : f32
    %89 = vector.broadcast %cst_38 : f32 to vector<32x1xf32>
    %90 = arith.addf %88, %89 : vector<32x1xf32>
    %91 = math.rsqrt %90 : vector<32x1xf32>
    %92 = vector.broadcast %91 : vector<32x1xf32> to vector<32x32xf32>
    %93 = arith.mulf %83, %92 : vector<32x32xf32>
    %94 = vector.broadcast %1 : vector<1x32xf32> to vector<32x32xf32>
    %95 = arith.mulf %93, %94 : vector<32x32xf32>
    %96 = vector.broadcast %2 : vector<1x32xf32> to vector<32x32xf32>
    %97 = arith.addf %95, %96 : vector<32x32xf32>
    %98 = arith.mulf %97, %15 : vector<32x32xf32>
    %99 = arith.addf %98, %19 : vector<32x32xf32>
    %100 = arith.truncf %99 : vector<32x32xf32> to vector<32x32xbf16>
    %c0_39 = arith.constant 0 : index
    %c0_40 = arith.constant 0 : index
    %101 = vector.load %arg7[%c0_39, %c0_40] : memref<32x128xbf16, #tpu.memory_space<vmem>>, vector<32x128xbf16>
    %cst_41 = arith.constant dense<0.000000e+00> : vector<32x128xf32>
    %102 = tpu.matmul %100, %101, %cst_41 {dimension_numbers = #tpu.dot_dimension_numbers<[1], [0], [0], [1], [0, 0, 1, 1], [], []>} : vector<32x32xbf16>, vector<32x128xbf16>, vector<32x128xf32> -> vector<32x128xf32>
    %103 = vector.broadcast %4 : vector<1x128xf32> to vector<32x128xf32>
    %104 = arith.addf %102, %103 : vector<32x128xf32>
    %cst_42 = arith.constant 5.000000e-01 : f32
    %105 = vector.broadcast %cst_42 : f32 to vector<32x128xf32>
    %106 = arith.mulf %105, %104 : vector<32x128xf32>
    %cst_43 = arith.constant 4.471500e-02 : f32
    %107 = vector.broadcast %cst_43 : f32 to vector<32x128xf32>
    %108 = arith.mulf %107, %104 : vector<32x128xf32>
    %109 = arith.mulf %108, %104 : vector<32x128xf32>
    %110 = arith.mulf %109, %104 : vector<32x128xf32>
    %111 = arith.addf %104, %110 : vector<32x128xf32>
    %cst_44 = arith.constant 0.797884583 : f32
    %112 = vector.broadcast %cst_44 : f32 to vector<32x128xf32>
    %113 = arith.mulf %112, %111 : vector<32x128xf32>
    %114 = math.tanh %113 : vector<32x128xf32>
    %cst_45 = arith.constant 1.000000e+00 : f32
    %115 = vector.broadcast %cst_45 : f32 to vector<32x128xf32>
    %116 = arith.addf %115, %114 : vector<32x128xf32>
    %117 = arith.mulf %106, %116 : vector<32x128xf32>
    %118 = arith.truncf %117 : vector<32x128xf32> to vector<32x128xbf16>
    %c0_46 = arith.constant 0 : index
    %c0_47 = arith.constant 0 : index
    %119 = vector.load %arg8[%c0_46, %c0_47] : memref<128x32xbf16, #tpu.memory_space<vmem>>, vector<128x32xbf16>
    %cst_48 = arith.constant dense<0.000000e+00> : vector<32x32xf32>
    %120 = tpu.matmul %118, %119, %cst_48 {dimension_numbers = #tpu.dot_dimension_numbers<[1], [0], [0], [1], [0, 0, 1, 1], [], []>} : vector<32x128xbf16>, vector<128x32xbf16>, vector<32x32xf32> -> vector<32x32xf32>
    %121 = vector.broadcast %5 : vector<1x32xf32> to vector<32x32xf32>
    %122 = arith.addf %120, %121 : vector<32x32xf32>
    %123 = arith.mulf %122, %11 : vector<32x32xf32>
    %124 = arith.addf %77, %123 : vector<32x32xf32>
    %c0_49 = arith.constant 0 : index
    %c0_50 = arith.constant 0 : index
    %125 = vector.load %arg10[%c0_49, %c0_50] : memref<32x32xf32, #tpu.memory_space<vmem>>, vector<32x32xf32>
    tpu.vector_store %arg10[%c0_49, %c0_50], %124 {strides = array<i32>} : memref<32x32xf32, #tpu.memory_space<vmem>>, vector<32x32xf32>,
    return
  }
  func.func @transform_0(%arg0: i32) -> (i32, i32) {
    %c0_i32 = arith.constant 0 : i32
    %c0_i32_0 = arith.constant 0 : i32
    %c0_i32_1 = arith.constant 0 : i32
    return %c0_i32, %c0_i32_0 : i32, i32
  }
  func.func @transform_1(%arg0: i32) -> (i32, i32, i32) {
    %c0_i32 = arith.constant 0 : i32
    %c0_i32_0 = arith.constant 0 : i32
    %c0_i32_1 = arith.constant 0 : i32
    %c0_i32_2 = arith.constant 0 : i32
    return %c0_i32, %c0_i32_0, %c0_i32_1 : i32, i32, i32
  }
  func.func @transform_2(%arg0: i32) -> (i32, i32) {
    %c0_i32 = arith.constant 0 : i32
    %c0_i32_0 = arith.constant 0 : i32
    %c0_i32_1 = arith.constant 0 : i32
    return %c0_i32, %c0_i32_0 : i32, i32
  }
  func.func @transform_3(%arg0: i32) -> (i32, i32) {
    %c0_i32 = arith.constant 0 : i32
    %c0_i32_0 = arith.constant 0 : i32
    %c0_i32_1 = arith.constant 0 : i32
    return %c0_i32, %c0_i32_0 : i32, i32
  }
  func.func @transform_4(%arg0: i32) -> (i32, i32) {
    %c0_i32 = arith.constant 0 : i32
    %c0_i32_0 = arith.constant 0 : i32
    %c0_i32_1 = arith.constant 0 : i32
    return %c0_i32, %c0_i32_0 : i32, i32
  }
  func.func @transform_5(%arg0: i32) -> (i32, i32) {
    %c0_i32 = arith.constant 0 : i32
    %c0_i32_0 = arith.constant 0 : i32
    %c0_i32_1 = arith.constant 0 : i32
    return %c0_i32, %c0_i32_0 : i32, i32
  }
  func.func @transform_6(%arg0: i32) -> (i32, i32) {
    %c0_i32 = arith.constant 0 : i32
    %c0_i32_0 = arith.constant 0 : i32
    %c0_i32_1 = arith.constant 0 : i32
    return %c0_i32, %c0_i32_0 : i32, i32
  }
  func.func @transform_7(%arg0: i32) -> (i32, i32) {
    %c0_i32 = arith.constant 0 : i32
    %c0_i32_0 = arith.constant 0 : i32
    %c0_i32_1 = arith.constant 0 : i32
    return %c0_i32, %c0_i32_0 : i32, i32
  }
  func.func @transform_8(%arg0: i32) -> (i32, i32) {
    %c0_i32 = arith.constant 0 : i32
    %c0_i32_0 = arith.constant 0 : i32
    %c0_i32_1 = arith.constant 0 : i32
    return %c0_i32, %c0_i32_0 : i32, i32
  }
  func.func @transform_9(%arg0: i32) -> (i32, i32) {
    %c0_i32 = arith.constant 0 : i32
    %c0_i32_0 = arith.constant 0 : i32
    %c0_i32_1 = arith.constant 0 : i32
    return %c0_i32, %c0_i32_0 : i32, i32
  }
}

</mosaic_0001>

<llo_original>
// kernel: tpu_custom_call.1
$region0: #{tpu_custom_call.1}
  #allocation0 [shape = 'u32[]', space=smem, size = 0x4, offset = 0x4, fixed_abs, tag = 'smem constant byte address 0x4 - core index']
  #allocation1 [shape = 'u32[144,128]{1,0:T(1,128)}', space=vmem, size = 0x12000, scoped, tag = 'internal scratch']
  %s0 = inlined_call_operand.vmem [shape: f32[32,32], index: 0, kind: input, shape index: {}]
  %s1 = inlined_call_operand.hbm [shape: f32[6,32,32], index: 1, kind: input, shape index: {}]
  %s2 = inlined_call_operand.vmem [shape: f32[32,128], index: 2, kind: input, shape index: {}]
  %s3 = inlined_call_operand.vmem [shape: bf16[128,32], index: 3, kind: input, shape index: {}]
  %s4 = inlined_call_operand.vmem [shape: bf16[32,96], index: 4, kind: input, shape index: {}]
  %s5 = inlined_call_operand.vmem [shape: bf16[32,32], index: 5, kind: input, shape index: {}]
  %s6 = inlined_call_operand.vmem [shape: bf16[32,128], index: 6, kind: input, shape index: {}]
  %s7 = inlined_call_operand.vmem [shape: bf16[128,32], index: 7, kind: input, shape index: {}]
  %s8 = inlined_call_operand.vmem [shape: f32[8,128], index: 8, kind: input, shape index: {}]
  %s9 = inlined_call_operand.hbm [shape: f32[32,32], index: 9, kind: output, shape index: {}]
  %s10 = sld [smem:[#allocation0]]
  $region50: #{tpu_custom_call.1} parent=0
    _
  %s12 = ssub.s32 1, %s10
  %s13 = scalar_select 0, %s12, %s10
  $region1: #{tpu_custom_call.1} parent=0
    #allocation2 [shape = 'u8[98304]{0}', space=vmem, size = 0x18000, scoped, tag = 'input window, operand 1, single buffered']
    #allocation3 [shape = 's32[1]{0}', space=sflag, size = 0x4, scoped, tag = 'scoped memory for tpu_custom_call.1']
    #allocation4 [shape = 's32[1]{0}', space=sflag, size = 0x4, scoped, tag = 'scoped memory for tpu_custom_call.1']
    #allocation5 [shape = 'u8[16384]{0}', space=vmem, size = 0x4000, scoped, tag = 'output window, operand 0, single buffered']
    %14 = vsyncpa [#allocation3], 0
    %15 = vsyncpa [#allocation4], 0
    // Predicated region
    $region2: #{tpu_custom_call.1} parent=1 // pred_check
      _
    $region3: #{tpu_custom_call.1} parent=1 // pred_check_branch
      %17 = sbr.rel (0) target = $region5
    $region4: #{tpu_custom_call.1} parent=1 // pred_region
      _
    $region5: #{tpu_custom_call.1} parent=1 // pred_fallthru
      _
    // Predicated region
    $region6: #{tpu_custom_call.1} parent=1 // pred_check
      _
    $region7: #{tpu_custom_call.1} parent=1 // pred_check_branch
      %19 = sbr.rel (0) target = $region9
    $region8: #{tpu_custom_call.1} parent=1 // pred_region
      %s21 = ssub.s32 3072, 3072
      %22 = vsyncadd [#allocation3], %s21
      %s23 = sshll.u32 [#allocation2], 4
      %s24 = int_to_ptr.vmem [resolvable:$true] %s23
      %29 = dma.hbm_to_vmem [thread:$0]  %s1, 3072, %s24, [#allocation3], 128, 128, 8
    $region9: #{tpu_custom_call.1} parent=1 // pred_fallthru
      _
    // Predicated region
    $region10: #{tpu_custom_call.1} parent=1 // pred_check
      _
    $region11: #{tpu_custom_call.1} parent=1 // pred_check_branch
      %31 = sbr.rel (0) target = $region13
    $region12: #{tpu_custom_call.1} parent=1 // pred_region
      _
    $region13: #{tpu_custom_call.1} parent=1 // pred_fallthru
      _
    // Predicated region
    $region14: #{tpu_custom_call.1} parent=1 // pred_check
      _
    $region15: #{tpu_custom_call.1} parent=1 // pred_check_branch
      %33 = sbr.rel (0) target = $region17
    $region16: #{tpu_custom_call.1} parent=1 // pred_region
      _
    $region17: #{tpu_custom_call.1} parent=1 // pred_fallthru
      _
    // Predicated region
    $region18: #{tpu_custom_call.1} parent=1 // pred_check
      _
    $region19: #{tpu_custom_call.1} parent=1 // pred_check_branch
      %35 = sbr.rel (0) target = $region21
    $region20: #{tpu_custom_call.1} parent=1 // pred_region
      _
    $region21: #{tpu_custom_call.1} parent=1 // pred_fallthru
      _
    // Predicated region
    $region22: #{tpu_custom_call.1} parent=1 // pred_check
      _
    $region23: #{tpu_custom_call.1} parent=1 // pred_check_branch
      %37 = sbr.rel (0) target = $region25
    $region24: #{tpu_custom_call.1} parent=1 // pred_region
      _
    $region25: #{tpu_custom_call.1} parent=1 // pred_fallthru
      _
    // Predicated region
    $region26: #{tpu_custom_call.1} parent=1 // pred_check
      _
    $region27: #{tpu_custom_call.1} parent=1 // pred_check_branch
      %39 = sbr.rel (0) target = $region29
    $region28: #{tpu_custom_call.1} parent=1 // pred_region
      _
    $region29: #{tpu_custom_call.1} parent=1 // pred_fallthru
      _
    // Predicated region
    $region30: #{tpu_custom_call.1} parent=1 // pred_check
      _
    $region31: #{tpu_custom_call.1} parent=1 // pred_check_branch
      %41 = sbr.rel (0) target = $region33
    $region32: #{tpu_custom_call.1} parent=1 // pred_region
      _
    $region33: #{tpu_custom_call.1} parent=1 // pred_fallthru
      _
    // Predicated region
    $region34: #{tpu_custom_call.1} parent=1 // pred_check
      _
    $region35: #{tpu_custom_call.1} parent=1 // pred_check_branch
      %43 = sbr.rel (0) target = $region37
    $region36: #{tpu_custom_call.1} parent=1 // pred_region
      _
    $region37: #{tpu_custom_call.1} parent=1 // pred_fallthru
      _
    // Predicated region
    $region38: #{tpu_custom_call.1} parent=1 // pred_check
      _
    $region39: #{tpu_custom_call.1} parent=1 // pred_check_branch
      %45 = sbr.rel (0) target = $region41
    $region40: #{tpu_custom_call.1} parent=1 // pred_region
      %46 = dma.done [#allocation3], 3072
    $region41: #{tpu_custom_call.1} parent=1 // pred_fallthru
      _
    %v48 = vld [vmem:[%s8] sm:$0xff]
    %v49 = vld [vmem:[%s0] sm:$0xff]
    %v50 = vld [vmem:[%s0 + $0x8] sm:$0xff]
    %v51 = vld [vmem:[%s0 + $0x10] sm:$0xff]
    %v52 = vld [vmem:[%s0 + $0x18] sm:$0xff]
    %v53 = vld [vmem:[#allocation2] sm:$0xff]
    %v54 = vld [vmem:[#allocation2 + $0x8] sm:$0xff]
    %v55 = vld [vmem:[#allocation2 + $0x10] sm:$0xff]
    %v56 = vld [vmem:[#allocation2 + $0x18] sm:$0xff]
    %s57 = scalar_lea.vmem [#allocation2], 32
    %v58 = vld [vmem:[%s57] sm:$0xff]
    %v59 = vld [vmem:[%s57 + $0x8] sm:$0xff]
    %v60 = vld [vmem:[%s57 + $0x10] sm:$0xff]
    %v61 = vld [vmem:[%s57 + $0x18] sm:$0xff]
    %s62 = scalar_lea.vmem [#allocation2], 64
    %v63 = vld [vmem:[%s62] sm:$0xff]
    %v64 = vld [vmem:[%s62 + $0x8] sm:$0xff]
    %v65 = vld [vmem:[%s62 + $0x10] sm:$0xff]
    %v66 = vld [vmem:[%s62 + $0x18] sm:$0xff]
    %s67 = scalar_lea.vmem [#allocation2], 96
    %v68 = vld [vmem:[%s67] sm:$0xff]
    %v69 = vld [vmem:[%s67 + $0x8] sm:$0xff]
    %v70 = vld [vmem:[%s67 + $0x10] sm:$0xff]
    %v71 = vld [vmem:[%s67 + $0x18] sm:$0xff]
    %s72 = scalar_lea.vmem [#allocation2], 128
    %v73 = vld [vmem:[%s72] sm:$0xff]
    %v74 = vld [vmem:[%s72 + $0x8] sm:$0xff]
    %v75 = vld [vmem:[%s72 + $0x10] sm:$0xff]
    %v76 = vld [vmem:[%s72 + $0x18] sm:$0xff]
    %s77 = scalar_lea.vmem [#allocation2], 160
    %v78 = vld [vmem:[%s77] sm:$0xff]
    %v79 = vld [vmem:[%s77 + $0x8] sm:$0xff]
    %v80 = vld [vmem:[%s77 + $0x10] sm:$0xff]
    %v81 = vld [vmem:[%s77 + $0x18] sm:$0xff]
    %v82 = vld [vmem:[%s3] sm:$0xf]
    %v83 = vld [vmem:[%s3 + $0x4] sm:$0xf]
    %v84 = vld [vmem:[%s3 + $0x8] sm:$0xf]
    %v85 = vld [vmem:[%s3 + $0xc] sm:$0xf]
    %v86 = vld [vmem:[%s3 + $0x10] sm:$0xf]
    %v87 = vld [vmem:[%s3 + $0x14] sm:$0xf]
    %v88 = vld [vmem:[%s3 + $0x18] sm:$0xf]
    %v89 = vld [vmem:[%s3 + $0x1c] sm:$0xf]
    %v90 = vld [vmem:[%s3 + $0x20] sm:$0xf]
    %v91 = vld [vmem:[%s3 + $0x24] sm:$0xf]
    %v92 = vld [vmem:[%s3 + $0x28] sm:$0xf]
    %v93 = vld [vmem:[%s3 + $0x2c] sm:$0xf]
    %v94 = vld [vmem:[%s3 + $0x30] sm:$0xf]
    %v95 = vld [vmem:[%s3 + $0x34] sm:$0xf]
    %v96 = vld [vmem:[%s3 + $0x38] sm:$0xf]
    %v97 = vld [vmem:[%s3 + $0x3c] sm:$0xf]
    %vm98 = vcmask 261120
    %v99 = vsel %vm98, %v49, 0.0
    %100 = vadd.xlane.f32.xlu0 %v99
    %v101 = vpop.xlane.xlu0 %100
    %v102 = vsel %vm98, %v50, 0.0
    %103 = vadd.xlane.f32.xlu0 %v102
    %v104 = vpop.xlane.xlu0 %103
    %v105 = vsel %vm98, %v51, 0.0
    %106 = vadd.xlane.f32.xlu0 %v105
    %v107 = vpop.xlane.xlu0 %106
    %v108 = vsel %vm98, %v52, 0.0
    %109 = vadd.xlane.f32.xlu0 %v108
    %v110 = vpop.xlane.xlu0 %109
    %v111 = vrcp.pop 32.0
    %v112 = vmul.f32 %v101, %v111
    %v113 = vmul.f32 %v104, %v111
    %v114 = vmul.f32 %v107, %v111
    %v115 = vmul.f32 %v110, %v111
    %v116 = vsub.f32 %v49, %v112
    %v117 = vsub.f32 %v50, %v113
    %v118 = vsub.f32 %v51, %v114
    %v119 = vsub.f32 %v52, %v115
    %v120 = vmul.f32 %v116, %v116
    %v121 = vmul.f32 %v117, %v117
    %v122 = vmul.f32 %v118, %v118
    %v123 = vmul.f32 %v119, %v119
    %v124 = vsel %vm98, %v120, 0.0
    %125 = vadd.xlane.f32.xlu0 %v124
    %v126 = vpop.xlane.xlu0 %125
    %v127 = vsel %vm98, %v121, 0.0
    %128 = vadd.xlane.f32.xlu0 %v127
    %v129 = vpop.xlane.xlu0 %128
    %v130 = vsel %vm98, %v122, 0.0
    %131 = vadd.xlane.f32.xlu0 %v130
    %v132 = vpop.xlane.xlu0 %131
    %v133 = vsel %vm98, %v123, 0.0
    %134 = vadd.xlane.f32.xlu0 %v133
    %v135 = vpop.xlane.xlu0 %134
    %v136 = vmul.f32 %v126, %v111
    %v137 = vmul.f32 %v129, %v111
    %v138 = vmul.f32 %v132, %v111
    %v139 = vmul.f32 %v135, %v111
    %v140 = vadd.f32 %v136, 1e-05
    %v141 = vadd.f32 %v137, 1e-05
    %v142 = vadd.f32 %v138, 1e-05
    %v143 = vadd.f32 %v139, 1e-05
    %v144 = vrsqrt.pop %v140
    %v145 = vrsqrt.pop %v141
    %v146 = vrsqrt.pop %v142
    %v147 = vrsqrt.pop %v143
    %v148 = vmul.f32 %v116, %v144
    %v149 = vmul.f32 %v117, %v145
    %v150 = vmul.f32 %v118, %v146
    %v151 = vmul.f32 %v119, %v147
    %v152 = vlaneseq
    %v153 = vshrl.u32 %v152, 7
    %v154 = vsub.s32 0, %v153
    %v155 = vrot.slane %v48, %v154
    %v156 = vmul.f32 %v148, %v155
    %v157 = vmul.f32 %v149, %v155
    %v158 = vmul.f32 %v150, %v155
    %v159 = vmul.f32 %v151, %v155
    %v160 = vlaneseq
    %v161 = vshrl.u32 %v160, 7
    %v162 = vsub.s32 1, %v161
    %v163 = vrot.slane %v48, %v162
    %v164 = vadd.f32 %v156, %v163
    %v165 = vadd.f32 %v157, %v163
    %v166 = vadd.f32 %v158, %v163
    %v167 = vadd.f32 %v159, %v163
    %v168 = vmul.f32 %v164, %v63
    %v169 = vmul.f32 %v165, %v64
    %v170 = vmul.f32 %v166, %v65
    %v171 = vmul.f32 %v167, %v66
    %v172 = vadd.f32 %v168, %v73
    %v173 = vadd.f32 %v169, %v74
    %v174 = vadd.f32 %v170, %v75
    %v175 = vadd.f32 %v171, %v76
    %v176 = vpack.c.bf16 %v173, %v172
    %v177 = vpack.c.bf16 %v175, %v174
    %v178 = vld [vmem:[%s4] sm:$0xf]
    %v179 = vld [vmem:[%s4 + $0x4] sm:$0xf]
    %v180 = vld [vmem:[%s4 + $0x8] sm:$0xf]
    %v181 = vld [vmem:[%s4 + $0xc] sm:$0xf]
    %v182 = vlaneseq
    %v183 = vshrl.u32 %v182, 7
    %v184 = vsub.s32 5, %v183
    %v185 = vrot.slane %v48, %v184
    %v190 = vunpack.c.l.b16 %v178
    %v191 = vunpack.c.l.b16 %v179
    %v192 = vunpack.c.l.b16 %v180
    %v193 = vunpack.c.l.b16 %v181
    %v194 = vpack.c.b16 %v191, %v190
    %v195 = vpack.c.b16 %v193, %v192
    %v199 = vsel %vm98, %v176, 0
    %v202 = vsel %vm98, %v177, 0
    %204 = vmatprep.subr.bf16.mxu0 0
    %205 = vmatpush1.bf16.msra.mxu0 %v194
    %206 = vmatprep.subr.bf16.mxu0 0
    %207 = vmatpush1.bf16.msra.mxu0 %v195
    %208 = vmatprep.subr.bf16.mxu0 0
    %209 = vmatpush1.bf16.msra.mxu0 0
    %210 = vmatprep.subr.bf16.mxu0 0
    %211 = vmatpush1.bf16.msra.mxu0 0
    %212 = vmatprep.subr.bf16.mxu0 0
    %213 = vmatpush1.bf16.msra.mxu0 0
    %214 = vmatprep.subr.bf16.mxu0 0
    %215 = vmatpush1.bf16.msra.mxu0 0
    %216 = vmatprep.subr.bf16.mxu0 0
    %217 = vmatpush1.bf16.msra.mxu0 0
    %218 = vmatprep.subr.bf16.mxu0 0
    %219 = vmatpush1.bf16.msra.mxu0 0
    %220 = vmatprep.subr.bf16.mxu0 0
    %221 = vmatpush1.bf16.msra.mxu0 0
    %222 = vmatprep.subr.bf16.mxu0 0
    %223 = vmatpush1.bf16.msra.mxu0 0
    %224 = vmatprep.subr.bf16.mxu0 0
    %225 = vmatpush1.bf16.msra.mxu0 0
    %226 = vmatprep.subr.bf16.mxu0 0
    %227 = vmatpush1.bf16.msra.mxu0 0
    %228 = vmatprep.subr.bf16.mxu0 0
    %229 = vmatpush1.bf16.msra.mxu0 0
    %230 = vmatprep.subr.bf16.mxu0 0
    %231 = vmatpush1.bf16.msra.mxu0 0
    %232 = vmatprep.subr.bf16.mxu0 0
    %233 = vmatpush1.bf16.msra.mxu0 0
    %234 = vmatprep.subr.bf16.mxu0 0
    %235 = vmatpush1.bf16.msra.mxu0 0
    %236 = vmatprep.mubr.bf16.mxu0 0
    %237 = vmatmul.mubr.bf16.gmra.mrb[0].mxu0 %v199
    %v238 = vpop.f32.mrb[0].mxu0
    %v239 = vadd.f32 %v185, %v238
    %v240 = vpop.f32.mrb[0].mxu0
    %v241 = vpop.f32.mrb[0].mxu0
    %v242 = vadd.f32 %v185, %v241
    %v243 = vpop.f32.mrb[0].mxu0
    %244 = vmatprep.mubr.bf16.mxu0 0
    %245 = vmatmul.mubr.bf16.gmra.mrb[0].mxu0 %v202
    %v246 = vpop.f32.mrb[0].mxu0
    %v247 = vadd.f32 %v185, %v246
    %v248 = vpop.f32.mrb[0].mxu0
    %v249 = vpop.f32.mrb[0].mxu0
    %v250 = vadd.f32 %v185, %v249
    %v251 = vpop.f32.mrb[0].mxu0
    %252 = vdwg.mxu0
    %v253 = vpack.c.bf16 %v242, %v239
    %v254 = vpack.c.bf16 %v250, %v247
    %v271 = vunpack.c.l.b16 %v82
    %v272 = vunpack.c.l.b16 %v83
    %v273 = vunpack.c.l.b16 %v84
    %v274 = vunpack.c.l.b16 %v85
    %v275 = vunpack.c.l.b16 %v86
    %v276 = vunpack.c.l.b16 %v87
    %v277 = vunpack.c.l.b16 %v88
    %v278 = vunpack.c.l.b16 %v89
    %v279 = vunpack.c.l.b16 %v90
    %v280 = vunpack.c.l.b16 %v91
    %v281 = vunpack.c.l.b16 %v92
    %v282 = vunpack.c.l.b16 %v93
    %v283 = vunpack.c.l.b16 %v94
    %v284 = vunpack.c.l.b16 %v95
    %v285 = vunpack.c.l.b16 %v96
    %v286 = vunpack.c.l.b16 %v97
    %v287 = vpack.c.b16 %v272, %v271
    %v288 = vpack.c.b16 %v274, %v273
    %v289 = vpack.c.b16 %v276, %v275
    %v290 = vpack.c.b16 %v278, %v277
    %v291 = vpack.c.b16 %v280, %v279
    %v292 = vpack.c.b16 %v282, %v281
    %v293 = vpack.c.b16 %v284, %v283
    %v294 = vpack.c.b16 %v286, %v285
    %295 = vrot.lane.b32.xlu0 %v287, 32
    %v296 = vpop.permute.xlu0 %295
    %297 = vrot.lane.b32.xlu0 %v288, 32
    %v298 = vpop.permute.xlu0 %297
    %299 = vrot.lane.b32.xlu0 %v289, 32
    %v300 = vpop.permute.xlu0 %299
    %301 = vrot.lane.b32.xlu0 %v290, 32
    %v302 = vpop.permute.xlu0 %301
    %303 = vrot.lane.b32.xlu0 %v291, 32
    %v304 = vpop.permute.xlu0 %303
    %305 = vrot.lane.b32.xlu0 %v292, 32
    %v306 = vpop.permute.xlu0 %305
    %307 = vrot.lane.b32.xlu0 %v293, 32
    %v308 = vpop.permute.xlu0 %307
    %309 = vrot.lane.b32.xlu0 %v294, 32
    %v310 = vpop.permute.xlu0 %309
    %v319 = vmul.bf16 %v253, %v296
    %v320 = vmul.bf16 %v254, %v298
    %v321 = vmul.bf16 %v253, %v300
    %v322 = vmul.bf16 %v254, %v302
    %v323 = vmul.bf16 %v253, %v304
    %v324 = vmul.bf16 %v254, %v306
    %v325 = vmul.bf16 %v253, %v308
    %v326 = vmul.bf16 %v254, %v310
    %327 = vrot.lane.b32.xlu0 %v287, 64
    %v328 = vpop.permute.xlu0 %327
    %329 = vrot.lane.b32.xlu0 %v288, 64
    %v330 = vpop.permute.xlu0 %329
    %331 = vrot.lane.b32.xlu0 %v289, 64
    %v332 = vpop.permute.xlu0 %331
    %333 = vrot.lane.b32.xlu0 %v290, 64
    %v334 = vpop.permute.xlu0 %333
    %335 = vrot.lane.b32.xlu0 %v291, 64
    %v336 = vpop.permute.xlu0 %335
    %337 = vrot.lane.b32.xlu0 %v292, 64
    %v338 = vpop.permute.xlu0 %337
    %339 = vrot.lane.b32.xlu0 %v293, 64
    %v340 = vpop.permute.xlu0 %339
    %341 = vrot.lane.b32.xlu0 %v294, 64
    %v342 = vpop.permute.xlu0 %341
    %v351 = vmul.bf16 %v253, %v328
    %v352 = vmul.bf16 %v254, %v330
    %v353 = vmul.bf16 %v253, %v332
    %v354 = vmul.bf16 %v254, %v334
    %v355 = vmul.bf16 %v253, %v336
    %v356 = vmul.bf16 %v254, %v338
    %v357 = vmul.bf16 %v253, %v340
    %v358 = vmul.bf16 %v254, %v342
    %v359 = vld [vmem:[%s2] sm:$0xff]
    %v360 = vld [vmem:[%s2 + $0x8] sm:$0xff]
    %v361 = vld [vmem:[%s2 + $0x10] sm:$0xff]
    %v362 = vld [vmem:[%s2 + $0x18] sm:$0xff]
    %371 = vrot.lane.b32.xlu0 %v319, 96
    %v372 = vpop.permute.xlu0 %371
    %373 = vrot.lane.b32.xlu0 %v320, 96
    %v374 = vpop.permute.xlu0 %373
    %375 = vrot.lane.b32.xlu0 %v321, 96
    %v376 = vpop.permute.xlu0 %375
    %377 = vrot.lane.b32.xlu0 %v322, 96
    %v378 = vpop.permute.xlu0 %377
    %379 = vrot.lane.b32.xlu0 %v323, 96
    %v380 = vpop.permute.xlu0 %379
    %381 = vrot.lane.b32.xlu0 %v324, 96
    %v382 = vpop.permute.xlu0 %381
    %383 = vrot.lane.b32.xlu0 %v325, 96
    %v384 = vpop.permute.xlu0 %383
    %385 = vrot.lane.b32.xlu0 %v326, 96
    %v386 = vpop.permute.xlu0 %385
    %v388 = vsel %vm98, %v253, 0
    %v391 = vsel %vm98, %v254, 0
    %v394 = vsel %vm98, %v372, 0
    %v397 = vsel %vm98, %v374, 0
    %v400 = vsel %vm98, %v376, 0
    %v403 = vsel %vm98, %v378, 0
    %v406 = vsel %vm98, %v380, 0
    %v409 = vsel %vm98, %v382, 0
    %v412 = vsel %vm98, %v384, 0
    %v415 = vsel %vm98, %v386, 0
    %417 = vmatprep.subr.bf16.mxu0 0
    %418 = vmatpush1.bf16.xpose.msra.mxu0 %v394
    %419 = vmatprep.subr.bf16.mxu0 0
    %420 = vmatpush1.bf16.xpose.msra.mxu0 %v397
    %421 = vmatprep.subr.bf16.mxu0 0
    %422 = vmatpush1.bf16.xpose.msra.mxu0 %v400
    %423 = vmatprep.subr.bf16.mxu0 0
    %424 = vmatpush1.bf16.xpose.msra.mxu0 %v403
    %425 = vmatprep.subr.bf16.mxu0 0
    %426 = vmatpush1.bf16.xpose.msra.mxu0 %v406
    %427 = vmatprep.subr.bf16.mxu0 0
    %428 = vmatpush1.bf16.xpose.msra.mxu0 %v409
    %429 = vmatprep.subr.bf16.mxu0 0
    %430 = vmatpush1.bf16.xpose.msra.mxu0 %v412
    %431 = vmatprep.subr.bf16.mxu0 0
    %432 = vmatpush1.bf16.xpose.msra.mxu0 %v415
    %433 = vmatprep.subr.bf16.mxu0 0
    %434 = vmatpush1.bf16.xpose.msra.mxu0 0
    %435 = vmatprep.subr.bf16.mxu0 0
    %436 = vmatpush1.bf16.xpose.msra.mxu0 0
    %437 = vmatprep.subr.bf16.mxu0 0
    %438 = vmatpush1.bf16.xpose.msra.mxu0 0
    %439 = vmatprep.subr.bf16.mxu0 0
    %440 = vmatpush1.bf16.xpose.msra.mxu0 0
    %441 = vmatprep.subr.bf16.mxu0 0
    %442 = vmatpush1.bf16.xpose.msra.mxu0 0
    %443 = vmatprep.subr.bf16.mxu0 0
    %444 = vmatpush1.bf16.xpose.msra.mxu0 0
    %445 = vmatprep.subr.bf16.mxu0 0
    %446 = vmatpush1.bf16.xpose.msra.mxu0 0
    %447 = vmatprep.subr.bf16.mxu0 0
    %448 = vmatpush1.bf16.xpose.msra.mxu0 0
    %449 = vmatprep.mubr.bf16.mxu0 0
    %450 = vmatmul.mubr.bf16.gmra.mrb[0].mxu0 %v388
    %v451 = vpop.f32.mrb[0].mxu0
    %v452 = vadd.f32 %v359, %v451
    %v453 = vpop.f32.mrb[0].mxu0
    %v454 = vpop.f32.mrb[0].mxu0
    %v455 = vadd.f32 %v360, %v454
    %v456 = vpop.f32.mrb[0].mxu0
    %457 = vmatprep.mubr.bf16.mxu0 0
    %458 = vmatmul.mubr.bf16.gmra.mrb[0].mxu0 %v391
    %v459 = vpop.f32.mrb[0].mxu0
    %v460 = vadd.f32 %v361, %v459
    %v461 = vpop.f32.mrb[0].mxu0
    %v462 = vpop.f32.mrb[0].mxu0
    %v463 = vadd.f32 %v362, %v462
    %v464 = vpop.f32.mrb[0].mxu0
    %465 = vdwg.mxu0
    %466 = vmax.xlane.f32.xlu0 %v452
    %v467 = vpop.xlane.xlu0 %466
    %468 = vmax.xlane.f32.xlu0 %v455
    %v469 = vpop.xlane.xlu0 %468
    %470 = vmax.xlane.f32.xlu0 %v460
    %v471 = vpop.xlane.xlu0 %470
    %472 = vmax.xlane.f32.xlu0 %v463
    %v473 = vpop.xlane.xlu0 %472
    %v474 = vsub.f32 %v452, %v467
    %v475 = vsub.f32 %v455, %v469
    %v476 = vsub.f32 %v460, %v471
    %v477 = vsub.f32 %v463, %v473
    %v478 = vmul.f32 %v474, 1.442695
    %v479 = vpow.pop %v478
    %v480 = vmul.f32 %v475, 1.442695
    %v481 = vpow.pop %v480
    %v482 = vmul.f32 %v476, 1.442695
    %v483 = vpow.pop %v482
    %v484 = vmul.f32 %v477, 1.442695
    %v485 = vpow.pop %v484
    %v486 = vpack.c.bf16 %v481, %v479
    %v487 = vpack.c.bf16 %v485, %v483
    %496 = vmatprep.subr.bf16.mxu0 0
    %497 = vmatpush1.bf16.msra.mxu0 %v287
    %498 = vmatprep.subr.bf16.mxu0 0
    %499 = vmatpush1.bf16.msra.mxu0 %v288
    %500 = vmatprep.subr.bf16.mxu0 0
    %501 = vmatpush1.bf16.msra.mxu0 %v289
    %502 = vmatprep.subr.bf16.mxu0 0
    %503 = vmatpush1.bf16.msra.mxu0 %v290
    %504 = vmatprep.subr.bf16.mxu0 0
    %505 = vmatpush1.bf16.msra.mxu0 %v291
    %506 = vmatprep.subr.bf16.mxu0 0
    %507 = vmatpush1.bf16.msra.mxu0 %v292
    %508 = vmatprep.subr.bf16.mxu0 0
    %509 = vmatpush1.bf16.msra.mxu0 %v293
    %510 = vmatprep.subr.bf16.mxu0 0
    %511 = vmatpush1.bf16.msra.mxu0 %v294
    %512 = vmatprep.subr.bf16.mxu0 0
    %513 = vmatpush1.bf16.msra.mxu0 0
    %514 = vmatprep.subr.bf16.mxu0 0
    %515 = vmatpush1.bf16.msra.mxu0 0
    %516 = vmatprep.subr.bf16.mxu0 0
    %517 = vmatpush1.bf16.msra.mxu0 0
    %518 = vmatprep.subr.bf16.mxu0 0
    %519 = vmatpush1.bf16.msra.mxu0 0
    %520 = vmatprep.subr.bf16.mxu0 0
    %521 = vmatpush1.bf16.msra.mxu0 0
    %522 = vmatprep.subr.bf16.mxu0 0
    %523 = vmatpush1.bf16.msra.mxu0 0
    %524 = vmatprep.subr.bf16.mxu0 0
    %525 = vmatpush1.bf16.msra.mxu0 0
    %526 = vmatprep.subr.bf16.mxu0 0
    %527 = vmatpush1.bf16.msra.mxu0 0
    %528 = vmatprep.mubr.bf16.mxu0 0
    %529 = vmatmul.mubr.bf16.gmra.mrb[0].mxu0 %v486
    %v530 = vpop.f32.mrb[0].mxu0
    %v531 = vadd.f32 0.0, %v530
    %v532 = vpop.f32.mrb[0].mxu0
    %v533 = vpop.f32.mrb[0].mxu0
    %v534 = vadd.f32 0.0, %v533
    %v535 = vpop.f32.mrb[0].mxu0
    %536 = vmatprep.mubr.bf16.mxu0 0
    %537 = vmatmul.mubr.bf16.gmra.mrb[0].mxu0 %v487
    %v538 = vpop.f32.mrb[0].mxu0
    %v539 = vadd.f32 0.0, %v538
    %v540 = vpop.f32.mrb[0].mxu0
    %v541 = vpop.f32.mrb[0].mxu0
    %v542 = vadd.f32 0.0, %v541
    %v543 = vpop.f32.mrb[0].mxu0
    %544 = vdwg.mxu0
    %553 = vrot.lane.b32.xlu0 %v351, 64
    %v554 = vpop.permute.xlu0 %553
    %555 = vrot.lane.b32.xlu0 %v352, 64
    %v556 = vpop.permute.xlu0 %555
    %557 = vrot.lane.b32.xlu0 %v353, 64
    %v558 = vpop.permute.xlu0 %557
    %559 = vrot.lane.b32.xlu0 %v354, 64
    %v560 = vpop.permute.xlu0 %559
    %561 = vrot.lane.b32.xlu0 %v355, 64
    %v562 = vpop.permute.xlu0 %561
    %563 = vrot.lane.b32.xlu0 %v356, 64
    %v564 = vpop.permute.xlu0 %563
    %565 = vrot.lane.b32.xlu0 %v357, 64
    %v566 = vpop.permute.xlu0 %565
    %567 = vrot.lane.b32.xlu0 %v358, 64
    %v568 = vpop.permute.xlu0 %567
    %577 = vmatprep.subr.bf16.mxu0 0
    %578 = vmatpush1.bf16.msra.mxu0 %v554
    %579 = vmatprep.subr.bf16.mxu0 0
    %580 = vmatpush1.bf16.msra.mxu0 %v556
    %581 = vmatprep.subr.bf16.mxu0 0
    %582 = vmatpush1.bf16.msra.mxu0 %v558
    %583 = vmatprep.subr.bf16.mxu0 0
    %584 = vmatpush1.bf16.msra.mxu0 %v560
    %585 = vmatprep.subr.bf16.mxu0 0
    %586 = vmatpush1.bf16.msra.mxu0 %v562
    %587 = vmatprep.subr.bf16.mxu0 0
    %588 = vmatpush1.bf16.msra.mxu0 %v564
    %589 = vmatprep.subr.bf16.mxu0 0
    %590 = vmatpush1.bf16.msra.mxu0 %v566
    %591 = vmatprep.subr.bf16.mxu0 0
    %592 = vmatpush1.bf16.msra.mxu0 %v568
    %593 = vmatprep.subr.bf16.mxu0 0
    %594 = vmatpush1.bf16.msra.mxu0 0
    %595 = vmatprep.subr.bf16.mxu0 0
    %596 = vmatpush1.bf16.msra.mxu0 0
    %597 = vmatprep.subr.bf16.mxu0 0
    %598 = vmatpush1.bf16.msra.mxu0 0
    %599 = vmatprep.subr.bf16.mxu0 0
    %600 = vmatpush1.bf16.msra.mxu0 0
    %601 = vmatprep.subr.bf16.mxu0 0
    %602 = vmatpush1.bf16.msra.mxu0 0
    %603 = vmatprep.subr.bf16.mxu0 0
    %604 = vmatpush1.bf16.msra.mxu0 0
    %605 = vmatprep.subr.bf16.mxu0 0
    %606 = vmatpush1.bf16.msra.mxu0 0
    %607 = vmatprep.subr.bf16.mxu0 0
    %608 = vmatpush1.bf16.msra.mxu0 0
    %609 = vmatprep.mubr.bf16.mxu0 0
    %610 = vmatmul.mubr.bf16.gmra.mrb[0].mxu0 %v486
    %v611 = vpop.f32.mrb[0].mxu0
    %v612 = vadd.f32 0.0, %v611
    %v613 = vpop.f32.mrb[0].mxu0
    %v614 = vpop.f32.mrb[0].mxu0
    %v615 = vadd.f32 0.0, %v614
    %v616 = vpop.f32.mrb[0].mxu0
    %617 = vmatprep.mubr.bf16.mxu0 0
    %618 = vmatmul.mubr.bf16.gmra.mrb[0].mxu0 %v487
    %v619 = vpop.f32.mrb[0].mxu0
    %v620 = vadd.f32 0.0, %v619
    %v621 = vpop.f32.mrb[0].mxu0
    %v622 = vpop.f32.mrb[0].mxu0
    %v623 = vadd.f32 0.0, %v622
    %v624 = vpop.f32.mrb[0].mxu0
    %625 = vdwg.mxu0
    %v626 = vrcp.pop %v531
    %v627 = vrcp.pop %v534
    %v628 = vrcp.pop %v539
    %v629 = vrcp.pop %v542
    %v630 = vmul.f32 %v612, %v626
    %v631 = vmul.f32 %v615, %v627
    %v632 = vmul.f32 %v620, %v628
    %v633 = vmul.f32 %v623, %v629
    %v634 = vpack.c.bf16 %v631, %v630
    %v635 = vpack.c.bf16 %v633, %v632
    %v636 = vld [vmem:[%s5] sm:$0xf]
    %v637 = vld [vmem:[%s5 + $0x4] sm:$0xf]
    %v638 = vld [vmem:[%s5 + $0x8] sm:$0xf]
    %v639 = vld [vmem:[%s5 + $0xc] sm:$0xf]
    %v640 = vlaneseq
    %v641 = vshrl.u32 %v640, 7
    %v642 = vsub.s32 2, %v641
    %v643 = vrot.slane %v48, %v642
    %v648 = vunpack.c.l.b16 %v636
    %v649 = vunpack.c.l.b16 %v637
    %v650 = vunpack.c.l.b16 %v638
    %v651 = vunpack.c.l.b16 %v639
    %v652 = vpack.c.b16 %v649, %v648
    %v653 = vpack.c.b16 %v651, %v650
    %v657 = vsel %vm98, %v634, 0
    %v660 = vsel %vm98, %v635, 0
    %662 = vmatprep.subr.bf16.mxu0 0
    %663 = vmatpush1.bf16.msra.mxu0 %v652
    %664 = vmatprep.subr.bf16.mxu0 0
    %665 = vmatpush1.bf16.msra.mxu0 %v653
    %666 = vmatprep.subr.bf16.mxu0 0
    %667 = vmatpush1.bf16.msra.mxu0 0
    %668 = vmatprep.subr.bf16.mxu0 0
    %669 = vmatpush1.bf16.msra.mxu0 0
    %670 = vmatprep.subr.bf16.mxu0 0
    %671 = vmatpush1.bf16.msra.mxu0 0
    %672 = vmatprep.subr.bf16.mxu0 0
    %673 = vmatpush1.bf16.msra.mxu0 0
    %674 = vmatprep.subr.bf16.mxu0 0
    %675 = vmatpush1.bf16.msra.mxu0 0
    %676 = vmatprep.subr.bf16.mxu0 0
    %677 = vmatpush1.bf16.msra.mxu0 0
    %678 = vmatprep.subr.bf16.mxu0 0
    %679 = vmatpush1.bf16.msra.mxu0 0
    %680 = vmatprep.subr.bf16.mxu0 0
    %681 = vmatpush1.bf16.msra.mxu0 0
    %682 = vmatprep.subr.bf16.mxu0 0
    %683 = vmatpush1.bf16.msra.mxu0 0
    %684 = vmatprep.subr.bf16.mxu0 0
    %685 = vmatpush1.bf16.msra.mxu0 0
    %686 = vmatprep.subr.bf16.mxu0 0
    %687 = vmatpush1.bf16.msra.mxu0 0
    %688 = vmatprep.subr.bf16.mxu0 0
    %689 = vmatpush1.bf16.msra.mxu0 0
    %690 = vmatprep.subr.bf16.mxu0 0
    %691 = vmatpush1.bf16.msra.mxu0 0
    %692 = vmatprep.subr.bf16.mxu0 0
    %693 = vmatpush1.bf16.msra.mxu0 0
    %694 = vmatprep.mubr.bf16.mxu0 0
    %695 = vmatmul.mubr.bf16.gmra.mrb[0].mxu0 %v657
    %v696 = vpop.f32.mrb[0].mxu0
    %v697 = vadd.f32 %v643, %v696
    %v698 = vpop.f32.mrb[0].mxu0
    %v699 = vpop.f32.mrb[0].mxu0
    %v700 = vadd.f32 %v643, %v699
    %v701 = vpop.f32.mrb[0].mxu0
    %702 = vmatprep.mubr.bf16.mxu0 0
    %703 = vmatmul.mubr.bf16.gmra.mrb[0].mxu0 %v660
    %v704 = vpop.f32.mrb[0].mxu0
    %v705 = vadd.f32 %v643, %v704
    %v706 = vpop.f32.mrb[0].mxu0
    %v707 = vpop.f32.mrb[0].mxu0
    %v708 = vadd.f32 %v643, %v707
    %v709 = vpop.f32.mrb[0].mxu0
    %710 = vdwg.mxu0
    %v711 = vmul.f32 %v697, %v53
    %v712 = vmul.f32 %v700, %v54
    %v713 = vmul.f32 %v705, %v55
    %v714 = vmul.f32 %v708, %v56
    %v715 = vadd.f32 %v49, %v711
    %v716 = vadd.f32 %v50, %v712
    %v717 = vadd.f32 %v51, %v713
    %v718 = vadd.f32 %v52, %v714
    %v719 = vsel %vm98, %v715, 0.0
    %720 = vadd.xlane.f32.xlu0 %v719
    %v721 = vpop.xlane.xlu0 %720
    %v722 = vsel %vm98, %v716, 0.0
    %723 = vadd.xlane.f32.xlu0 %v722
    %v724 = vpop.xlane.xlu0 %723
    %v725 = vsel %vm98, %v717, 0.0
    %726 = vadd.xlane.f32.xlu0 %v725
    %v727 = vpop.xlane.xlu0 %726
    %v728 = vsel %vm98, %v718, 0.0
    %729 = vadd.xlane.f32.xlu0 %v728
    %v730 = vpop.xlane.xlu0 %729
    %v731 = vmul.f32 %v721, %v111
    %v732 = vmul.f32 %v724, %v111
    %v733 = vmul.f32 %v727, %v111
    %v734 = vmul.f32 %v730, %v111
    %v735 = vsub.f32 %v715, %v731
    %v736 = vsub.f32 %v716, %v732
    %v737 = vsub.f32 %v717, %v733
    %v738 = vsub.f32 %v718, %v734
    %v739 = vmul.f32 %v735, %v735
    %v740 = vmul.f32 %v736, %v736
    %v741 = vmul.f32 %v737, %v737
    %v742 = vmul.f32 %v738, %v738
    %v743 = vsel %vm98, %v739, 0.0
    %744 = vadd.xlane.f32.xlu0 %v743
    %v745 = vpop.xlane.xlu0 %744
    %v746 = vsel %vm98, %v740, 0.0
    %747 = vadd.xlane.f32.xlu0 %v746
    %v748 = vpop.xlane.xlu0 %747
    %v749 = vsel %vm98, %v741, 0.0
    %750 = vadd.xlane.f32.xlu0 %v749
    %v751 = vpop.xlane.xlu0 %750
    %v752 = vsel %vm98, %v742, 0.0
    %753 = vadd.xlane.f32.xlu0 %v752
    %v754 = vpop.xlane.xlu0 %753
    %v755 = vmul.f32 %v745, %v111
    %v756 = vmul.f32 %v748, %v111
    %v757 = vmul.f32 %v751, %v111
    %v758 = vmul.f32 %v754, %v111
    %v759 = vadd.f32 %v755, 1e-05
    %v760 = vadd.f32 %v756, 1e-05
    %v761 = vadd.f32 %v757, 1e-05
    %v762 = vadd.f32 %v758, 1e-05
    %v763 = vrsqrt.pop %v759
    %v764 = vrsqrt.pop %v760
    %v765 = vrsqrt.pop %v761
    %v766 = vrsqrt.pop %v762
    %v767 = vmul.f32 %v735, %v763
    %v768 = vmul.f32 %v736, %v764
    %v769 = vmul.f32 %v737, %v765
    %v770 = vmul.f32 %v738, %v766
    %v771 = vmul.f32 %v767, %v155
    %v772 = vmul.f32 %v768, %v155
    %v773 = vmul.f32 %v769, %v155
    %v774 = vmul.f32 %v770, %v155
    %v775 = vadd.f32 %v771, %v163
    %v776 = vadd.f32 %v772, %v163
    %v777 = vadd.f32 %v773, %v163
    %v778 = vadd.f32 %v774, %v163
    %v779 = vmul.f32 %v775, %v68
    %v780 = vmul.f32 %v776, %v69
    %v781 = vmul.f32 %v777, %v70
    %v782 = vmul.f32 %v778, %v71
    %v783 = vadd.f32 %v779, %v78
    %v784 = vadd.f32 %v780, %v79
    %v785 = vadd.f32 %v781, %v80
    %v786 = vadd.f32 %v782, %v81
    %v787 = vpack.c.bf16 %v784, %v783
    %v788 = vpack.c.bf16 %v786, %v785
    %v789 = vld [vmem:[%s6] sm:$0xf]
    %v790 = vld [vmem:[%s6 + $0x4] sm:$0xf]
    %v791 = vld [vmem:[%s6 + $0x8] sm:$0xf]
    %v792 = vld [vmem:[%s6 + $0xc] sm:$0xf]
    %v793 = vlaneseq
    %v794 = vshrl.u32 %v793, 7
    %v795 = vsub.s32 3, %v794
    %v796 = vrot.slane %v48, %v795
    %v801 = vunpack.c.l.b16 %v789
    %v802 = vunpack.c.l.b16 %v790
    %v803 = vunpack.c.l.b16 %v791
    %v804 = vunpack.c.l.b16 %v792
    %v805 = vpack.c.b16 %v802, %v801
    %v806 = vpack.c.b16 %v804, %v803
    %v810 = vsel %vm98, %v787, 0
    %v813 = vsel %vm98, %v788, 0
    %815 = vmatprep.subr.bf16.mxu0 0
    %816 = vmatpush1.bf16.msra.mxu0 %v805
    %817 = vmatprep.subr.bf16.mxu0 0
    %818 = vmatpush1.bf16.msra.mxu0 %v806
    %819 = vmatprep.subr.bf16.mxu0 0
    %820 = vmatpush1.bf16.msra.mxu0 0
    %821 = vmatprep.subr.bf16.mxu0 0
    %822 = vmatpush1.bf16.msra.mxu0 0
    %823 = vmatprep.subr.bf16.mxu0 0
    %824 = vmatpush1.bf16.msra.mxu0 0
    %825 = vmatprep.subr.bf16.mxu0 0
    %826 = vmatpush1.bf16.msra.mxu0 0
    %827 = vmatprep.subr.bf16.mxu0 0
    %828 = vmatpush1.bf16.msra.mxu0 0
    %829 = vmatprep.subr.bf16.mxu0 0
    %830 = vmatpush1.bf16.msra.mxu0 0
    %831 = vmatprep.subr.bf16.mxu0 0
    %832 = vmatpush1.bf16.msra.mxu0 0
    %833 = vmatprep.subr.bf16.mxu0 0
    %834 = vmatpush1.bf16.msra.mxu0 0
    %835 = vmatprep.subr.bf16.mxu0 0
    %836 = vmatpush1.bf16.msra.mxu0 0
    %837 = vmatprep.subr.bf16.mxu0 0
    %838 = vmatpush1.bf16.msra.mxu0 0
    %839 = vmatprep.subr.bf16.mxu0 0
    %840 = vmatpush1.bf16.msra.mxu0 0
    %841 = vmatprep.subr.bf16.mxu0 0
    %842 = vmatpush1.bf16.msra.mxu0 0
    %843 = vmatprep.subr.bf16.mxu0 0
    %844 = vmatpush1.bf16.msra.mxu0 0
    %845 = vmatprep.subr.bf16.mxu0 0
    %846 = vmatpush1.bf16.msra.mxu0 0
    %847 = vmatprep.mubr.bf16.mxu0 0
    %848 = vmatmul.mubr.bf16.gmra.mrb[0].mxu0 %v810
    %v849 = vpop.f32.mrb[0].mxu0
    %v850 = vadd.f32 %v796, %v849
    %v851 = vpop.f32.mrb[0].mxu0
    %v852 = vpop.f32.mrb[0].mxu0
    %v853 = vadd.f32 %v796, %v852
    %v854 = vpop.f32.mrb[0].mxu0
    %855 = vmatprep.mubr.bf16.mxu0 0
    %856 = vmatmul.mubr.bf16.gmra.mrb[0].mxu0 %v813
    %v857 = vpop.f32.mrb[0].mxu0
    %v858 = vadd.f32 %v796, %v857
    %v859 = vpop.f32.mrb[0].mxu0
    %v860 = vpop.f32.mrb[0].mxu0
    %v861 = vadd.f32 %v796, %v860
    %v862 = vpop.f32.mrb[0].mxu0
    %863 = vdwg.mxu0
    %v864 = vmul.f32 %v850, 0.5
    %v865 = vmul.f32 %v853, 0.5
    %v866 = vmul.f32 %v858, 0.5
    %v867 = vmul.f32 %v861, 0.5
    %v868 = vmul.f32 %v850, 0.044715
    %v869 = vmul.f32 %v853, 0.044715
    %v870 = vmul.f32 %v858, 0.044715
    %v871 = vmul.f32 %v861, 0.044715
    %v872 = vmul.f32 %v868, %v850
    %v873 = vmul.f32 %v869, %v853
    %v874 = vmul.f32 %v870, %v858
    %v875 = vmul.f32 %v871, %v861
    %v876 = vmul.f32 %v872, %v850
    %v877 = vmul.f32 %v873, %v853
    %v878 = vmul.f32 %v874, %v858
    %v879 = vmul.f32 %v875, %v861
    %v880 = vadd.f32 %v850, %v876
    %v881 = vadd.f32 %v853, %v877
    %v882 = vadd.f32 %v858, %v878
    %v883 = vadd.f32 %v861, %v879
    %v884 = vmul.f32 %v880, 0.7978846
    %v885 = vmul.f32 %v881, 0.7978846
    %v886 = vmul.f32 %v882, 0.7978846
    %v887 = vmul.f32 %v883, 0.7978846
    %v888 = vtanh.pop %v884
    %v889 = vtanh.pop %v885
    %v890 = vtanh.pop %v886
    %v891 = vtanh.pop %v887
    %v892 = vadd.f32 %v888, 1.0
    %v893 = vadd.f32 %v889, 1.0
    %v894 = vadd.f32 %v890, 1.0
    %v895 = vadd.f32 %v891, 1.0
    %v896 = vmul.f32 %v864, %v892
    %v897 = vmul.f32 %v865, %v893
    %v898 = vmul.f32 %v866, %v894
    %v899 = vmul.f32 %v867, %v895
    %v900 = vpack.c.bf16 %v897, %v896
    %v901 = vpack.c.bf16 %v899, %v898
    %v902 = vld [vmem:[%s7] sm:$0xf]
    %v903 = vld [vmem:[%s7 + $0x4] sm:$0xf]
    %v904 = vld [vmem:[%s7 + $0x8] sm:$0xf]
    %v905 = vld [vmem:[%s7 + $0xc] sm:$0xf]
    %v906 = vld [vmem:[%s7 + $0x10] sm:$0xf]
    %v907 = vld [vmem:[%s7 + $0x14] sm:$0xf]
    %v908 = vld [vmem:[%s7 + $0x18] sm:$0xf]
    %v909 = vld [vmem:[%s7 + $0x1c] sm:$0xf]
    %v910 = vld [vmem:[%s7 + $0x20] sm:$0xf]
    %v911 = vld [vmem:[%s7 + $0x24] sm:$0xf]
    %v912 = vld [vmem:[%s7 + $0x28] sm:$0xf]
    %v913 = vld [vmem:[%s7 + $0x2c] sm:$0xf]
    %v914 = vld [vmem:[%s7 + $0x30] sm:$0xf]
    %v915 = vld [vmem:[%s7 + $0x34] sm:$0xf]
    %v916 = vld [vmem:[%s7 + $0x38] sm:$0xf]
    %v917 = vld [vmem:[%s7 + $0x3c] sm:$0xf]
    %v918 = vlaneseq
    %v919 = vshrl.u32 %v918, 7
    %v920 = vsub.s32 4, %v919
    %v921 = vrot.slane %v48, %v920
    %v938 = vunpack.c.l.b16 %v902
    %v939 = vunpack.c.l.b16 %v903
    %v940 = vunpack.c.l.b16 %v904
    %v941 = vunpack.c.l.b16 %v905
    %v942 = vunpack.c.l.b16 %v906
    %v943 = vunpack.c.l.b16 %v907
    %v944 = vunpack.c.l.b16 %v908
    %v945 = vunpack.c.l.b16 %v909
    %v946 = vunpack.c.l.b16 %v910
    %v947 = vunpack.c.l.b16 %v911
    %v948 = vunpack.c.l.b16 %v912
    %v949 = vunpack.c.l.b16 %v913
    %v950 = vunpack.c.l.b16 %v914
    %v951 = vunpack.c.l.b16 %v915
    %v952 = vunpack.c.l.b16 %v916
    %v953 = vunpack.c.l.b16 %v917
    %v954 = vpack.c.b16 %v939, %v938
    %v955 = vpack.c.b16 %v941, %v940
    %v956 = vpack.c.b16 %v943, %v942
    %v957 = vpack.c.b16 %v945, %v944
    %v958 = vpack.c.b16 %v947, %v946
    %v959 = vpack.c.b16 %v949, %v948
    %v960 = vpack.c.b16 %v951, %v950
    %v961 = vpack.c.b16 %v953, %v952
    %970 = vmatprep.subr.bf16.mxu0 0
    %971 = vmatpush1.bf16.msra.mxu0 %v954
    %972 = vmatprep.subr.bf16.mxu0 0
    %973 = vmatpush1.bf16.msra.mxu0 %v955
    %974 = vmatprep.subr.bf16.mxu0 0
    %975 = vmatpush1.bf16.msra.mxu0 %v956
    %976 = vmatprep.subr.bf16.mxu0 0
    %977 = vmatpush1.bf16.msra.mxu0 %v957
    %978 = vmatprep.subr.bf16.mxu0 0
    %979 = vmatpush1.bf16.msra.mxu0 %v958
    %980 = vmatprep.subr.bf16.mxu0 0
    %981 = vmatpush1.bf16.msra.mxu0 %v959
    %982 = vmatprep.subr.bf16.mxu0 0
    %983 = vmatpush1.bf16.msra.mxu0 %v960
    %984 = vmatprep.subr.bf16.mxu0 0
    %985 = vmatpush1.bf16.msra.mxu0 %v961
    %986 = vmatprep.subr.bf16.mxu0 0
    %987 = vmatpush1.bf16.msra.mxu0 0
    %988 = vmatprep.subr.bf16.mxu0 0
    %989 = vmatpush1.bf16.msra.mxu0 0
    %990 = vmatprep.subr.bf16.mxu0 0
    %991 = vmatpush1.bf16.msra.mxu0 0
    %992 = vmatprep.subr.bf16.mxu0 0
    %993 = vmatpush1.bf16.msra.mxu0 0
    %994 = vmatprep.subr.bf16.mxu0 0
    %995 = vmatpush1.bf16.msra.mxu0 0
    %996 = vmatprep.subr.bf16.mxu0 0
    %997 = vmatpush1.bf16.msra.mxu0 0
    %998 = vmatprep.subr.bf16.mxu0 0
    %999 = vmatpush1.bf16.msra.mxu0 0
    %1000 = vmatprep.subr.bf16.mxu0 0
    %1001 = vmatpush1.bf16.msra.mxu0 0
    %1002 = vmatprep.mubr.bf16.mxu0 0
    %1003 = vmatmul.mubr.bf16.gmra.mrb[0].mxu0 %v900
    %v1004 = vpop.f32.mrb[0].mxu0
    %v1005 = vadd.f32 %v921, %v1004
    %v1006 = vpop.f32.mrb[0].mxu0
    %v1007 = vpop.f32.mrb[0].mxu0
    %v1008 = vadd.f32 %v921, %v1007
    %v1009 = vpop.f32.mrb[0].mxu0
    %1010 = vmatprep.mubr.bf16.mxu0 0
    %1011 = vmatmul.mubr.bf16.gmra.mrb[0].mxu0 %v901
    %v1012 = vpop.f32.mrb[0].mxu0
    %v1013 = vadd.f32 %v921, %v1012
    %v1014 = vpop.f32.mrb[0].mxu0
    %v1015 = vpop.f32.mrb[0].mxu0
    %v1016 = vadd.f32 %v921, %v1015
    %v1017 = vpop.f32.mrb[0].mxu0
    %1018 = vdwg.mxu0
    %v1019 = vmul.f32 %v1005, %v58
    %v1020 = vmul.f32 %v1008, %v59
    %v1021 = vmul.f32 %v1013, %v60
    %v1022 = vmul.f32 %v1016, %v61
    %v1023 = vadd.f32 %v715, %v1019
    %v1024 = vadd.f32 %v716, %v1020
    %v1025 = vadd.f32 %v717, %v1021
    %v1026 = vadd.f32 %v718, %v1022
    %1027 = vst.msk [vmem:[#allocation5] sm:$0xff] %vm98, %v1023
    %1028 = vst.msk [vmem:[#allocation5 + $0x8] sm:$0xff] %vm98, %v1024
    %1029 = vst.msk [vmem:[#allocation5 + $0x10] sm:$0xff] %vm98, %v1025
    %1030 = vst.msk [vmem:[#allocation5 + $0x18] sm:$0xff] %vm98, %v1026
    // Predicated region
    $region42: #{tpu_custom_call.1} parent=1 // pred_check
      _
    $region43: #{tpu_custom_call.1} parent=1 // pred_check_branch
      %1032 = sbr.rel (0) target = $region45
    $region44: #{tpu_custom_call.1} parent=1 // pred_region
      %s1034 = ssub.s32 512, 512
      %1035 = vsyncadd [#allocation4], %s1034
      %s1036 = sshll.u32 [#allocation5], 4
      %s1037 = int_to_ptr.vmem [resolvable:$true] %s1036
      %1042 = dma.vmem_to_hbm [thread:$0]  %s1037, 512, %s9, [#allocation4], 128, 128, 8
    $region45: #{tpu_custom_call.1} parent=1 // pred_fallthru
      _
    // Predicated region
    $region46: #{tpu_custom_call.1} parent=1 // pred_check
      _
    $region47: #{tpu_custom_call.1} parent=1 // pred_check_branch
      %1044 = sbr.rel (0) target = $region49
    $region48: #{tpu_custom_call.1} parent=1 // pred_region
      %1045 = dma.done [#allocation4], 512
    $region49: #{tpu_custom_call.1} parent=1 // pred_fallthru
      _
    %1046 = vsyncpa [#allocation3], 1
    %1047 = vsyncpa [#allocation4], 1

</llo_original>
